<compile_context>
chip_gen: v7x
topology: tpu7x:2x2x1
jax: 0.10.0
libtpu: 0.0.40
codegen_flags: <defaults>
</compile_context>

<pallas_src>
import functools

import jax
import jax.numpy as jnp
from jax.experimental import pallas as pl
from jax.experimental.pallas import tpu as pltpu


def _discriminator_kernel(xT_ref, w1_ref, b1_ref, w2_ref, b2_ref, alpha_ref, out_ref):
    """Fused MLP forward on a lane-dense transposed tile.

    xT_ref:    (D_in, TN)  input tile, columns = batch elements
    w1_ref:    (H, D_in)   linear01 weight (torch layout)
    b1_ref:    (H, 1)      linear01 bias (column)
    w2_ref:    (H, 1)      linear02 weight (as a column)
    b2_ref:    (1,)        linear02 bias               [SMEM scalar]
    alpha_ref: (1,)        PReLU slope (0.0 => ReLU)   [SMEM scalar]
    out_ref:   (1, TN)     sigmoid output tile (lane-dense)
    """
    xT = xT_ref[...]                                   # (D_in, TN)
    w1 = w1_ref[...]                                   # (H, D_in)
    d_in = xT.shape[0]

    # ---- linear01 as D_in broadcast FMAs on the VPU (MXU is useless at K=D_in) ----
    h = w1[:, 0:1] * xT[0:1, :] + b1_ref[...]          # (H, TN)
    for k in range(1, d_in):                           # static, tiny unrolled loop
        h = h + w1[:, k:k + 1] * xT[k:k + 1, :]

    # ---- PReLU with a single shared learnable slope (alpha == 0 gives plain ReLU) ----
    alpha = alpha_ref[0]
    h = jnp.where(h >= 0.0, h, alpha * h)

    # ---- linear02 as a sublane (hidden-axis) reduction ----
    z = jnp.sum(h * w2_ref[...], axis=0, keepdims=True) + b2_ref[0]   # (1, TN)

    # ---- sigmoid (exact; exp goes to the EUP, the (1, TN) divide is negligible) ----
    out_ref[...] = 1.0 / (1.0 + jnp.exp(-z))


@functools.partial(jax.jit, static_argnames=("block_cols", "activation"))
def discriminator_forward(x, w1, b1, w2, b2, alpha, *, block_cols=1024,
                          activation="PReLU"):
    """x: (N, D_in) float32. Params in torch layout:
       w1 (25, D_in), b1 (25,), w2 (1, 25), b2 (1,), alpha (1,).
       Returns (N, 1) float32 sigmoid output."""
    n, d_in = x.shape
    hdim = w1.shape[0]

    # Lane-dense tile: multiple of 128 columns, capped by the (128-padded) batch size.
    n_min = ((n + 127) // 128) * 128
    tn = max(128, min(((block_cols + 127) // 128) * 128, n_min))
    n_pad = ((n + tn - 1) // tn) * tn
    grid = (n_pad // tn,)

    # Layout plumbing (not compute hoisting): transpose + zero-pad the batch axis.
    xT = jnp.transpose(x.astype(jnp.float32))          # (D_in, N)
    if n_pad != n:
        xT = jnp.pad(xT, ((0, 0), (0, n_pad - n)))

    b1_col = jnp.reshape(b1, (hdim, 1)).astype(jnp.float32)
    w2_col = jnp.reshape(w2, (hdim, 1)).astype(jnp.float32)   # (1, H) -> (H, 1)
    b2_s = jnp.reshape(b2, (1,)).astype(jnp.float32)
    if activation == "ReLU":
        alpha_s = jnp.zeros((1,), jnp.float32)                # ReLU == PReLU with slope 0
    else:
        alpha_s = jnp.reshape(alpha, (1,)).astype(jnp.float32)

    out_p = pl.pallas_call(
        _discriminator_kernel,
        out_shape=jax.ShapeDtypeStruct((1, n_pad), jnp.float32),
        grid_spec=pltpu.PrefetchScalarGridSpec(
            num_scalar_prefetch=0,
            grid=grid,
            in_specs=[
                pl.BlockSpec((d_in, tn), lambda i: (0, i)),          # x^T tile (lane-dense)
                pl.BlockSpec((hdim, d_in), lambda i: (0, 0)),        # w1 (resident)
                pl.BlockSpec((hdim, 1), lambda i: (0, 0)),           # b1 column
                pl.BlockSpec((hdim, 1), lambda i: (0, 0)),           # w2 column
                pl.BlockSpec(memory_space=pltpu.MemorySpace.SMEM),   # b2 scalar
                pl.BlockSpec(memory_space=pltpu.MemorySpace.SMEM),   # alpha scalar
            ],
            out_specs=pl.BlockSpec((1, tn), lambda i: (0, i)),
        ),
        compiler_params=pltpu.CompilerParams(
            dimension_semantics=("parallel",),
        ),
    )(xT, w1.astype(jnp.float32), b1_col, w2_col, b2_s, alpha_s)

    return jnp.transpose(out_p[:, :n])                 # (N, 1)


def init_params(key, input_dim=2, hidden=25):
    """PyTorch-style init: nn.Linear U[-1/sqrt(fan_in), 1/sqrt(fan_in)], nn.PReLU slope 0.25.
    Params kept in torch layout: w (out, in)."""
    k1, k2, k3, k4 = jax.random.split(key, 4)
    bound1 = 1.0 / jnp.sqrt(jnp.float32(input_dim))
    bound2 = 1.0 / jnp.sqrt(jnp.float32(hidden))
    w1 = jax.random.uniform(k1, (hidden, input_dim), jnp.float32, -bound1, bound1)
    b1 = jax.random.uniform(k2, (hidden,), jnp.float32, -bound1, bound1)
    w2 = jax.random.uniform(k3, (1, hidden), jnp.float32, -bound2, bound2)
    b2 = jax.random.uniform(k4, (1,), jnp.float32, -bound2, bound2)
    alpha = jnp.full((1,), 0.25, jnp.float32)
    return w1, b1, w2, b2, alpha


def reference_forward(x, w1, b1, w2, b2, alpha, activation="PReLU"):
    h = x @ w1.T + b1
    if activation == "ReLU":
        h = jnp.maximum(h, 0.0)
    else:
        h = jnp.where(h >= 0.0, h, alpha[0] * h)
    z = h @ w2.T + b2
    return 1.0 / (1.0 + jnp.exp(-z))


if __name__ == "__main__":
    key = jax.random.PRNGKey(0)
    kx, kx2, kp = jax.random.split(key, 3)

    batch, input_dim, hidden = 8, 2, 25
    w1, b1, w2, b2, alpha = init_params(kp, input_dim=input_dim, hidden=hidden)

    # Small demo batch (single grid step after padding to 128 lanes).
    x = jax.random.normal(kx, (batch, input_dim), jnp.float32)
    out = discriminator_forward(x, w1, b1, w2, b2, alpha)
    out = jax.block_until_ready(out)
    ref = reference_forward(x, w1, b1, w2, b2, alpha)
    assert out.shape == (batch, 1)
    assert jnp.allclose(out, ref, atol=1e-5, rtol=1e-5), "mismatch vs reference (small)"

    # Larger, non-multiple batch exercising multi-step grid + padded tail.
    n2 = 1000
    x2 = jax.random.normal(kx2, (n2, input_dim), jnp.float32)
    out2 = discriminator_forward(x2, w1, b1, w2, b2, alpha, block_cols=256)
    out2 = jax.block_until_ready(out2)
    ref2 = reference_forward(x2, w1, b1, w2, b2, alpha)
    assert out2.shape == (n2, 1)
    assert jnp.allclose(out2, ref2, atol=1e-5, rtol=1e-5), "mismatch vs reference (large)"

    print("KERNEL_OK")
</pallas_src>

<mosaic_0001>
module attributes {stable_mosaic.version = 11 : i64} {
  func.func @_discriminator_kernel(%arg0: i32, %arg1: memref<2x128xf32, #tpu.memory_space<vmem>>, %arg2: memref<25x2xf32, #tpu.memory_space<vmem>>, %arg3: memref<25x1xf32, #tpu.memory_space<vmem>>, %arg4: memref<25x1xf32, #tpu.memory_space<vmem>>, %arg5: memref<1xf32, #tpu.memory_space<smem>>, %arg6: memref<1xf32, #tpu.memory_space<smem>>, %arg7: memref<1x128xf32, #tpu.memory_space<vmem>>) attributes {dimension_semantics = [#tpu.dimension_semantics<parallel>], iteration_bounds = array<i64: 1>, scalar_prefetch = 0 : i64, scratch_operands = 0 : i64, tpu.core_type = #tpu.core_type<tc>, window_params = [{transform_indices = @transform_0, window_bounds = array<i64: 2, 128>}, {pipeline_mode = #tpu.pipeline_mode<synchronous>, transform_indices = @transform_1, window_bounds = array<i64: 25, 2>}, {pipeline_mode = #tpu.pipeline_mode<synchronous>, transform_indices = @transform_2, window_bounds = array<i64: 25, 1>}, {pipeline_mode = #tpu.pipeline_mode<synchronous>, transform_indices = @transform_3, window_bounds = array<i64: 25, 1>}, {transform_indices = @transform_4, window_bounds = array<i64: 1>}, {transform_indices = @transform_5, window_bounds = array<i64: 1>}, {transform_indices = @transform_6, window_bounds = array<i64: 1, 128>}]} {
    %c0 = arith.constant 0 : index
    %c0_0 = arith.constant 0 : index
    %0 = vector.load %arg1[%c0, %c0_0] : memref<2x128xf32, #tpu.memory_space<vmem>>, vector<2x128xf32>
    %c0_1 = arith.constant 0 : index
    %c0_2 = arith.constant 0 : index
    %1 = vector.load %arg2[%c0_1, %c0_2] : memref<25x2xf32, #tpu.memory_space<vmem>>, vector<25x2xf32>
    %2 = vector.extract_strided_slice %1 {offsets = [0, 0], sizes = [25, 1], strides = [1, 1]} : vector<25x2xf32> to vector<25x1xf32>
    %3 = vector.extract_strided_slice %0 {offsets = [0, 0], sizes = [1, 128], strides = [1, 1]} : vector<2x128xf32> to vector<1x128xf32>
    %4 = vector.broadcast %2 : vector<25x1xf32> to vector<25x128xf32>
    %5 = vector.broadcast %3 : vector<1x128xf32> to vector<25x128xf32>
    %6 = arith.mulf %4, %5 : vector<25x128xf32>
    %c0_3 = arith.constant 0 : index
    %c0_4 = arith.constant 0 : index
    %7 = vector.load %arg3[%c0_3, %c0_4] : memref<25x1xf32, #tpu.memory_space<vmem>>, vector<25x1xf32>
    %8 = vector.broadcast %7 : vector<25x1xf32> to vector<25x128xf32>
    %9 = arith.addf %6, %8 : vector<25x128xf32>
    %10 = vector.extract_strided_slice %1 {offsets = [0, 1], sizes = [25, 1], strides = [1, 1]} : vector<25x2xf32> to vector<25x1xf32>
    %11 = vector.extract_strided_slice %0 {offsets = [1, 0], sizes = [1, 128], strides = [1, 1]} : vector<2x128xf32> to vector<1x128xf32>
    %12 = vector.broadcast %10 : vector<25x1xf32> to vector<25x128xf32>
    %13 = vector.broadcast %11 : vector<1x128xf32> to vector<25x128xf32>
    %14 = arith.mulf %12, %13 : vector<25x128xf32>
    %15 = arith.addf %9, %14 : vector<25x128xf32>
    %c0_5 = arith.constant 0 : index
    %16 = memref.load %arg6[%c0_5] : memref<1xf32, #tpu.memory_space<smem>>
    %cst = arith.constant 0.000000e+00 : f32
    %17 = vector.broadcast %cst : f32 to vector<25x128xf32>
    %18 = arith.cmpf oge, %15, %17 : vector<25x128xf32>
    %19 = vector.broadcast %16 : f32 to vector<25x128xf32>
    %20 = arith.mulf %19, %15 : vector<25x128xf32>
    %21 = arith.select %18, %15, %20 : vector<25x128xi1>, vector<25x128xf32>
    %c0_6 = arith.constant 0 : index
    %c0_7 = arith.constant 0 : index
    %22 = vector.load %arg4[%c0_6, %c0_7] : memref<25x1xf32, #tpu.memory_space<vmem>>, vector<25x1xf32>
    %23 = vector.broadcast %22 : vector<25x1xf32> to vector<25x128xf32>
    %24 = arith.mulf %21, %23 : vector<25x128xf32>
    %cst_8 = arith.constant dense<0.000000e+00> : vector<128xf32>
    %25 = vector.multi_reduction <add>, %24, %cst_8 [0] : vector<25x128xf32> to vector<128xf32>
    %26 = vector.shape_cast %25 : vector<128xf32> to vector<1x128xf32>
    %c0_9 = arith.constant 0 : index
    %27 = memref.load %arg5[%c0_9] : memref<1xf32, #tpu.memory_space<smem>>
    %28 = vector.broadcast %27 : f32 to vector<1x128xf32>
    %29 = arith.addf %26, %28 : vector<1x128xf32>
    %cst_10 = arith.constant 0.000000e+00 : f32
    %30 = vector.broadcast %cst_10 : f32 to vector<1x128xf32>
    %31 = arith.subf %30, %29 : vector<1x128xf32>
    %32 = math.exp %31 : vector<1x128xf32>
    %cst_11 = arith.constant 1.000000e+00 : f32
    %33 = vector.broadcast %cst_11 : f32 to vector<1x128xf32>
    %34 = arith.addf %33, %32 : vector<1x128xf32>
    %cst_12 = arith.constant 1.000000e+00 : f32
    %35 = vector.broadcast %cst_12 : f32 to vector<1x128xf32>
    %36 = arith.divf %35, %34 : vector<1x128xf32>
    %c0_13 = arith.constant 0 : index
    %c0_14 = arith.constant 0 : index
    %37 = vector.load %arg7[%c0_13, %c0_14] : memref<1x128xf32, #tpu.memory_space<vmem>>, vector<1x128xf32>
    tpu.vector_store %arg7[%c0_13, %c0_14], %36 {strides = array<i32>} : memref<1x128xf32, #tpu.memory_space<vmem>>, vector<1x128xf32>,
    return
  }
  func.func @transform_0(%arg0: i32) -> (i32, i32) {
    %c0_i32 = arith.constant 0 : i32
    %c0_i32_0 = arith.constant 0 : i32
    return %c0_i32, %arg0 : i32, i32
  }
  func.func @transform_1(%arg0: i32) -> (i32, i32) {
    %c0_i32 = arith.constant 0 : i32
    %c0_i32_0 = arith.constant 0 : i32
    %c0_i32_1 = arith.constant 0 : i32
    return %c0_i32, %c0_i32_0 : i32, i32
  }
  func.func @transform_2(%arg0: i32) -> (i32, i32) {
    %c0_i32 = arith.constant 0 : i32
    %c0_i32_0 = arith.constant 0 : i32
    %c0_i32_1 = arith.constant 0 : i32
    return %c0_i32, %c0_i32_0 : i32, i32
  }
  func.func @transform_3(%arg0: i32) -> (i32, i32) {
    %c0_i32 = arith.constant 0 : i32
    %c0_i32_0 = arith.constant 0 : i32
    %c0_i32_1 = arith.constant 0 : i32
    return %c0_i32, %c0_i32_0 : i32, i32
  }
  func.func @transform_4(%arg0: i32) -> i32 {
    %c0_i32 = arith.constant 0 : i32
    %c0_i32_0 = arith.constant 0 : i32
    return %c0_i32 : i32
  }
  func.func @transform_5(%arg0: i32) -> i32 {
    %c0_i32 = arith.constant 0 : i32
    %c0_i32_0 = arith.constant 0 : i32
    return %c0_i32 : i32
  }
  func.func @transform_6(%arg0: i32) -> (i32, i32) {
    %c0_i32 = arith.constant 0 : i32
    %c0_i32_0 = arith.constant 0 : i32
    return %c0_i32, %arg0 : i32, i32
  }
}

</mosaic_0001>

<llo_original>
// kernel: discriminator_forward.1
$region0: #{discriminator_forward.1}
  #allocation0 [shape = 'u32[]', space=smem, size = 0x4, offset = 0x4, fixed_abs, tag = 'smem constant byte address 0x4 - core index']
  #allocation1 [shape = 'u32[144,128]{1,0:T(1,128)}', space=vmem, size = 0x12000, scoped, tag = 'internal scratch']
  #allocation2 [shape = 'f32[1]{0:T(128)S(6)}', space=smem, size = 0x200, scoped, tag = 'scoped memory for discriminator_forward.1']
  #allocation3 [shape = 'f32[1]{0:T(128)S(6)}', space=smem, size = 0x200, scoped, tag = 'scoped memory for discriminator_forward.1']
  %s0 = inlined_call_operand.vmem [shape: f32[2,128], index: 0, kind: input, shape index: {}]
  %s1 = inlined_call_operand.vmem [shape: f32[25,2], index: 1, kind: input, shape index: {}]
  %s2 = inlined_call_operand.vmem [shape: f32[25,1], index: 2, kind: input, shape index: {}]
  %s3 = inlined_call_operand.vmem [shape: f32[25,1], index: 3, kind: input, shape index: {}]
  %s4 = inlined_call_operand.<no memory space> [shape: f32[1], index: 4, kind: input, shape index: {}]
  %s5 = inlined_call_operand.<no memory space> [shape: f32[1], index: 5, kind: input, shape index: {}]
  %s6 = inlined_call_operand.vmem [shape: f32[1,128], index: 6, kind: output, shape index: {}]
  %s7 = sld [smem:[#allocation0]]
  $region34: #{discriminator_forward.1} parent=0
    _
  %s9 = ssub.s32 1, %s7
  %s10 = scalar_select 0, %s9, %s7
  %11 = sst [smem:[#allocation2]] %s4
  %12 = sst [smem:[#allocation3]] %s5
  // Predicated region
  $region2: #{discriminator_forward.1} parent=0 // pred_check
    _
  $region3: #{discriminator_forward.1} parent=0 // pred_check_branch
    %14 = sbr.rel (0) target = $region5
  $region4: #{discriminator_forward.1} parent=0 // pred_region
    _
  $region5: #{discriminator_forward.1} parent=0 // pred_fallthru
    _
  // Predicated region
  $region6: #{discriminator_forward.1} parent=0 // pred_check
    _
  $region7: #{discriminator_forward.1} parent=0 // pred_check_branch
    %16 = sbr.rel (0) target = $region9
  $region8: #{discriminator_forward.1} parent=0 // pred_region
    _
  $region9: #{discriminator_forward.1} parent=0 // pred_fallthru
    _
  // Predicated region
  $region10: #{discriminator_forward.1} parent=0 // pred_check
    _
  $region11: #{discriminator_forward.1} parent=0 // pred_check_branch
    %18 = sbr.rel (0) target = $region13
  $region12: #{discriminator_forward.1} parent=0 // pred_region
    _
  $region13: #{discriminator_forward.1} parent=0 // pred_fallthru
    _
  // Predicated region
  $region14: #{discriminator_forward.1} parent=0 // pred_check
    _
  $region15: #{discriminator_forward.1} parent=0 // pred_check_branch
    %20 = sbr.rel (0) target = $region17
  $region16: #{discriminator_forward.1} parent=0 // pred_region
    _
  $region17: #{discriminator_forward.1} parent=0 // pred_fallthru
    _
  // Predicated region
  $region18: #{discriminator_forward.1} parent=0 // pred_check
    _
  $region19: #{discriminator_forward.1} parent=0 // pred_check_branch
    %22 = sbr.rel (0) target = $region21
  $region20: #{discriminator_forward.1} parent=0 // pred_region
    _
  $region21: #{discriminator_forward.1} parent=0 // pred_fallthru
    _
  // Predicated region
  $region22: #{discriminator_forward.1} parent=0 // pred_check
    _
  $region23: #{discriminator_forward.1} parent=0 // pred_check_branch
    %24 = sbr.rel (0) target = $region25
  $region24: #{discriminator_forward.1} parent=0 // pred_region
    _
  $region25: #{discriminator_forward.1} parent=0 // pred_fallthru
    _
  %v25 = vld [vmem:[%s0] sm:$0x3]
  %v26 = vld [vmem:[%s1] sm:$0xff]
  %v27 = vld [vmem:[%s1 + $0x8] sm:$0xff]
  %v28 = vld [vmem:[%s1 + $0x10] sm:$0xff]
  %v29 = vld [vmem:[%s1 + $0x18] sm:$0x1]
  %31 = vset.pattern.permute.xlu0 0
  %32 = vperm.xlu0 %31, %v26
  %v33 = vpop.permute.xlu0 %32
  %36 = vset.pattern.permute.xlu0 0
  %37 = vperm.xlu0 %36, %v27
  %v38 = vpop.permute.xlu0 %37
  %41 = vset.pattern.permute.xlu0 0
  %42 = vperm.xlu0 %41, %v28
  %v43 = vpop.permute.xlu0 %42
  %46 = vset.pattern.permute.xlu0 0
  %47 = vperm.xlu0 %46, %v29
  %v48 = vpop.permute.xlu0 %47
  %v50 = vlaneseq
  %v51 = vshrl.u32 %v50, 7
  %v52 = vsub.s32 0, %v51
  %v53 = vrot.slane %v25, %v52
  %v54 = vmul.f32 %v33, %v53
  %v55 = vmul.f32 %v38, %v53
  %v56 = vmul.f32 %v43, %v53
  %v57 = vmul.f32 %v48, %v53
  %v58 = vld [vmem:[%s2] sm:$0xff]
  %v59 = vld [vmem:[%s2 + $0x8] sm:$0xff]
  %v60 = vld [vmem:[%s2 + $0x10] sm:$0xff]
  %v61 = vld [vmem:[%s2 + $0x18] sm:$0x1]
  %63 = vset.pattern.permute.xlu0 0
  %64 = vperm.xlu0 %63, %v58
  %v65 = vpop.permute.xlu0 %64
  %68 = vset.pattern.permute.xlu0 0
  %69 = vperm.xlu0 %68, %v59
  %v70 = vpop.permute.xlu0 %69
  %73 = vset.pattern.permute.xlu0 0
  %74 = vperm.xlu0 %73, %v60
  %v75 = vpop.permute.xlu0 %74
  %78 = vset.pattern.permute.xlu0 0
  %79 = vperm.xlu0 %78, %v61
  %v80 = vpop.permute.xlu0 %79
  %v82 = vadd.f32 %v54, %v65
  %v83 = vadd.f32 %v55, %v70
  %v84 = vadd.f32 %v56, %v75
  %v85 = vadd.f32 %v57, %v80
  %86 = vset.pattern.permute.xlu0 1
  %87 = vperm.xlu0 %86, %v26
  %v88 = vpop.permute.xlu0 %87
  %90 = vset.pattern.permute.xlu0 1
  %91 = vperm.xlu0 %90, %v27
  %v92 = vpop.permute.xlu0 %91
  %94 = vset.pattern.permute.xlu0 1
  %95 = vperm.xlu0 %94, %v28
  %v96 = vpop.permute.xlu0 %95
  %98 = vset.pattern.permute.xlu0 1
  %99 = vperm.xlu0 %98, %v29
  %v100 = vpop.permute.xlu0 %99
  %v102 = vlaneseq
  %v103 = vshrl.u32 %v102, 7
  %v104 = vsub.s32 1, %v103
  %v105 = vrot.slane %v25, %v104
  %v106 = vmul.f32 %v88, %v105
  %v107 = vmul.f32 %v92, %v105
  %v108 = vmul.f32 %v96, %v105
  %v109 = vmul.f32 %v100, %v105
  %v110 = vadd.f32 %v82, %v106
  %v111 = vadd.f32 %v83, %v107
  %v112 = vadd.f32 %v84, %v108
  %v113 = vadd.f32 %v85, %v109
  %s114 = sld [smem:[#allocation3]]
  %vm115 = vcmp.ge.f32.partialorder %v110, 0.0
  %vm116 = vcmp.ge.f32.partialorder %v111, 0.0
  %vm117 = vcmp.ge.f32.partialorder %v112, 0.0
  %vm118 = vcmp.ge.f32.partialorder %v113, 0.0
  %v119 = vstv %s114
  %v120 = vmul.f32 %v119, %v110
  %v121 = vmul.f32 %v119, %v111
  %v122 = vmul.f32 %v119, %v112
  %v123 = vmul.f32 %v119, %v113
  %v124 = vsel %vm115, %v110, %v120
  %v125 = vsel %vm116, %v111, %v121
  %v126 = vsel %vm117, %v112, %v122
  %v127 = vsel %vm118, %v113, %v123
  %v128 = vld [vmem:[%s3] sm:$0xff]
  %v129 = vld [vmem:[%s3 + $0x8] sm:$0xff]
  %v130 = vld [vmem:[%s3 + $0x10] sm:$0xff]
  %v131 = vld [vmem:[%s3 + $0x18] sm:$0x1]
  %133 = vset.pattern.permute.xlu0 0
  %134 = vperm.xlu0 %133, %v128
  %v135 = vpop.permute.xlu0 %134
  %138 = vset.pattern.permute.xlu0 0
  %139 = vperm.xlu0 %138, %v129
  %v140 = vpop.permute.xlu0 %139
  %143 = vset.pattern.permute.xlu0 0
  %144 = vperm.xlu0 %143, %v130
  %v145 = vpop.permute.xlu0 %144
  %148 = vset.pattern.permute.xlu0 0
  %149 = vperm.xlu0 %148, %v131
  %v150 = vpop.permute.xlu0 %149
  %v152 = vmul.f32 %v124, %v135
  %v153 = vmul.f32 %v125, %v140
  %v154 = vmul.f32 %v126, %v145
  %v155 = vmul.f32 %v127, %v150
  %v156 = vadd.f32 %v152, %v153
  %v157 = vadd.f32 %v156, %v154
  %vm158 = vcmask 1040384
  %v159 = vsel %vm158, %v155, 0.0
  %v160 = vadd.f32 %v157, %v159
  %v161 = vrot.slane %v160, 4
  %v162 = vadd.f32 %v160, %v161
  %v163 = vrot.slane %v162, 2
  %v164 = vadd.f32 %v162, %v163
  %v165 = vrot.slane %v164, 1
  %v166 = vadd.f32 %v164, %v165
  %s167 = sld [smem:[#allocation2]]
  %v168 = vstv %s167
  %v169 = vadd.f32 %v166, %v168
  %v170 = vsub.f32 0.0, %v169
  %v171 = vmul.f32 %v170, 1.442695
  %v172 = vpow.pop %v171
  %v173 = vadd.f32 %v172, 1.0
  %v174 = vrcp.pop %v173
  %v175 = vmul.f32 1.0, %v174
  %176 = vst [vmem:[%s6] sm:$0x1] %v175
  // Predicated region
  $region26: #{discriminator_forward.1} parent=0 // pred_check
    _
  $region27: #{discriminator_forward.1} parent=0 // pred_check_branch
    %178 = sbr.rel (0) target = $region29
  $region28: #{discriminator_forward.1} parent=0 // pred_region
    _
  $region29: #{discriminator_forward.1} parent=0 // pred_fallthru
    _
  // Predicated region
  $region30: #{discriminator_forward.1} parent=0 // pred_check
    _
  $region31: #{discriminator_forward.1} parent=0 // pred_check_branch
    %180 = sbr.rel (0) target = $region33
  $region32: #{discriminator_forward.1} parent=0 // pred_region
    _
  $region33: #{discriminator_forward.1} parent=0 // pred_fallthru
    _

</llo_original>
